<compile_context>
chip_gen: v7x
topology: tpu7x:2x2x1
jax: 0.10.0
libtpu: 0.0.40
codegen_flags: <defaults>
</compile_context>

<pallas_src>
import functools

import jax
import jax.numpy as jnp
from jax.experimental import pallas as pl
from jax.experimental.pallas import tpu as pltpu


_OUT_BLOCK_BUDGET_BYTES = 2 * 1024 * 1024  # keep well inside scoped VMEM everywhere


def _tile_block_kernel(x_ref, o_ref, *, rh: int, rw: int):
    """Write rh*rw copies of the input block into the output block.

    rh == rw == 1 is a pure block copy.  Replication uses static Python loops
    with static slices (no concatenation, no oversized intermediate): each
    output element is written exactly once.
    """
    x = x_ref[...]
    if rh == 1 and rw == 1:
        o_ref[...] = x
        return
    h = x.shape[-2]
    w = x.shape[-1]
    for ih in range(rh):
        for iw in range(rw):
            o_ref[:, :, ih * h:(ih + 1) * h, iw * w:(iw + 1) * w] = x


class OnnxTilePallas:
    """Pallas analogue of onnx2torch2 OnnxTile for 4D NCHW inputs."""

    def __init__(self, repeats=None):
        self.repeats = list(repeats) if repeats else None

    def __call__(self, input_tensor, repeats_tensor=None):
        if self.repeats:
            repeats = self.repeats
        else:
            # TODO(synk): traced (dynamic) repeats imply a dynamic output shape,
            # which JAX cannot express; this fallback needs concrete values.
            repeats = [int(r) for r in jax.device_get(repeats_tensor)]

        # TODO(synk): generalize beyond 4D inputs / rank-4 repeats.
        assert input_tensor.ndim == 4 and len(repeats) == 4, \
            "this kernel instantiation handles 4D NCHW inputs with 4 repeats"

        N, C, H, W = input_tensor.shape
        rN, rC, rH, rW = (int(r) for r in repeats)
        dtype = input_tensor.dtype
        itemsize = jnp.dtype(dtype).itemsize
        # Minimum sublane granularity (8 for f32, 16 for bf16, 32 for int8).
        sub = 8 * max(1, 4 // itemsize)

        out_shape = (N * rN, C * rC, H * rH, W * rW)
        in_bytes = N * C * H * W * itemsize
        out_bytes = (N * rN) * (C * rC) * (H * rH) * (W * rW) * itemsize
        cost = pl.CostEstimate(flops=0, transcendentals=0,
                               bytes_accessed=in_bytes + out_bytes)

        def compiler_params(n_grid_dims):
            return pltpu.CompilerParams(
                dimension_semantics=("parallel",) * n_grid_dims,
                vmem_limit_bytes=32 * 1024 * 1024,
            )

        # --- Lane-dense fold path: only N/C are tiled -> fold H*W into the
        # lane dim so stores are as wide as possible.
        if rH == 1 and rW == 1 and (rC == 1 or C % sub == 0):
            x3 = input_tensor.reshape(N, C, H * W)
            out3 = pl.pallas_call(
                functools.partial(_tile_block_kernel, rh=1, rw=1),
                out_shape=jax.ShapeDtypeStruct((N * rN, C * rC, H * W), dtype),
                grid=(rN, rC),
                in_specs=[pl.BlockSpec((N, C, H * W), lambda i, j: (0, 0, 0))],
                out_specs=pl.BlockSpec((N, C, H * W), lambda i, j: (i, j, 0)),
                compiler_params=compiler_params(2),
                cost_estimate=cost,
            )(x3)
            return out3.reshape(out_shape)

        # --- General 4D path.
        # Put rH in the grid when the resulting output blocks stay
        # (8,128)-legal; otherwise replicate H in-kernel via slice-stores.
        h_in_grid = (rH == 1) or (H % sub == 0)

        if h_in_grid:
            # Bound per-step output block size by sub-tiling H if needed.
            th = H
            if (N * C * H * (W * rW) * itemsize > _OUT_BLOCK_BUDGET_BYTES
                    and H % sub == 0):
                divisors = [d for d in range(sub, H + 1, sub) if H % d == 0]
                fitting = [d for d in divisors
                           if N * C * d * (W * rW) * itemsize
                           <= _OUT_BLOCK_BUDGET_BYTES]
                th = max(fitting) if fitting else min(divisors)
            n_ht = H // th

            grid = (rN, rC, rH, n_ht)
            # Input block index is constant when n_ht == 1 -> DMA'd once.
            in_spec = pl.BlockSpec(
                (N, C, th, W), lambda i, j, h, t: (0, 0, t, 0))
            out_spec = pl.BlockSpec(
                (N, C, th, W * rW), lambda i, j, h, t: (i, j, h * n_ht + t, 0))
            kernel = functools.partial(_tile_block_kernel, rh=1, rw=rW)
        else:
            grid = (rN, rC)
            in_spec = pl.BlockSpec((N, C, H, W), lambda i, j: (0, 0, 0, 0))
            out_spec = pl.BlockSpec(
                (N, C, H * rH, W * rW), lambda i, j: (i, j, 0, 0))
            kernel = functools.partial(_tile_block_kernel, rh=rH, rw=rW)

        return pl.pallas_call(
            kernel,
            out_shape=jax.ShapeDtypeStruct(out_shape, dtype),
            grid=grid,
            in_specs=[in_spec],
            out_specs=out_spec,
            compiler_params=compiler_params(len(grid)),
            cost_estimate=cost,
        )(input_tensor)


if __name__ == "__main__":
    key = jax.random.PRNGKey(0)

    # Case 1: main path — N/H replication in the grid, W replication via
    # slice-stores keeping the full W*rW lane extent in the output block.
    x = jax.random.normal(key, (2, 4, 16, 16), dtype=jnp.float32)
    repeats = [2, 1, 2, 2]
    module = OnnxTilePallas(repeats)
    repeats_arr = jnp.array(repeats, dtype=jnp.int32)  # mirrors torch signature
    out = jax.block_until_ready(module(x, repeats_arr))
    ref = jnp.tile(x, repeats)
    assert out.shape == ref.shape and out.dtype == ref.dtype
    assert bool(jnp.array_equal(out, ref)), "case 1 mismatch vs jnp.tile"

    # Case 2: lane-dense fold path — only leading dims tiled (H*W folded to lanes).
    repeats2 = [2, 1, 1, 1]
    out2 = jax.block_until_ready(OnnxTilePallas(repeats2)(x))
    ref2 = jnp.tile(x, repeats2)
    assert out2.shape == ref2.shape
    assert bool(jnp.array_equal(out2, ref2)), "case 2 mismatch vs jnp.tile"

    # Case 3: fallback path — H not a sublane multiple, H replicated in-kernel.
    x3 = jax.random.normal(jax.random.PRNGKey(1), (1, 2, 12, 16), dtype=jnp.float32)
    repeats3 = [2, 1, 2, 1]
    out3 = jax.block_until_ready(OnnxTilePallas(repeats3)(x3))
    ref3 = jnp.tile(x3, repeats3)
    assert out3.shape == ref3.shape
    assert bool(jnp.array_equal(out3, ref3)), "case 3 mismatch vs jnp.tile"

    print("KERNEL_OK")
</pallas_src>

<mosaic_0001>
module attributes {stable_mosaic.version = 11 : i64} {
  func.func @_tile_block_kernel(%arg0: i32, %arg1: i32, %arg2: i32, %arg3: i32, %arg4: memref<2x4x16x16xf32, #tpu.memory_space<vmem>>, %arg5: memref<2x4x16x32xf32, #tpu.memory_space<vmem>>) attributes {dimension_semantics = [#tpu.dimension_semantics<parallel>, #tpu.dimension_semantics<parallel>, #tpu.dimension_semantics<parallel>, #tpu.dimension_semantics<parallel>], iteration_bounds = array<i64: 2, 1, 2, 1>, scalar_prefetch = 0 : i64, scratch_operands = 0 : i64, tpu.core_type = #tpu.core_type<tc>, window_params = [{transform_indices = @transform_0, window_bounds = array<i64: 2, 4, 16, 16>}, {transform_indices = @transform_1, window_bounds = array<i64: 2, 4, 16, 32>}]} {
    %c0 = arith.constant 0 : index
    %c0_0 = arith.constant 0 : index
    %c0_1 = arith.constant 0 : index
    %c0_2 = arith.constant 0 : index
    %0 = vector.load %arg4[%c0, %c0_0, %c0_1, %c0_2] : memref<2x4x16x16xf32, #tpu.memory_space<vmem>>, vector<2x4x16x16xf32>
    %c0_3 = arith.constant 0 : index
    %c0_4 = arith.constant 0 : index
    %c0_5 = arith.constant 0 : index
    %c0_6 = arith.constant 0 : index
    %1 = vector.load %arg5[%c0_3, %c0_4, %c0_5, %c0_6] : memref<2x4x16x32xf32, #tpu.memory_space<vmem>>, vector<2x4x16x16xf32>
    tpu.vector_store %arg5[%c0_3, %c0_4, %c0_5, %c0_6], %0 {strides = array<i32>} : memref<2x4x16x32xf32, #tpu.memory_space<vmem>>, vector<2x4x16x16xf32>,
    %c0_7 = arith.constant 0 : index
    %c0_8 = arith.constant 0 : index
    %c0_9 = arith.constant 0 : index
    %c16 = arith.constant 16 : index
    %2 = vector.load %arg5[%c0_7, %c0_8, %c0_9, %c16] : memref<2x4x16x32xf32, #tpu.memory_space<vmem>>, vector<2x4x16x16xf32>
    tpu.vector_store %arg5[%c0_7, %c0_8, %c0_9, %c16], %0 {strides = array<i32>} : memref<2x4x16x32xf32, #tpu.memory_space<vmem>>, vector<2x4x16x16xf32>,
    return
  }
  func.func @transform_0(%arg0: i32, %arg1: i32, %arg2: i32, %arg3: i32) -> (i32, i32, i32, i32) {
    %c0_i32 = arith.constant 0 : i32
    %c0_i32_0 = arith.constant 0 : i32
    %c0_i32_1 = arith.constant 0 : i32
    %c0_i32_2 = arith.constant 0 : i32
    return %c0_i32, %c0_i32_0, %arg3, %c0_i32_1 : i32, i32, i32, i32
  }
  func.func @transform_1(%arg0: i32, %arg1: i32, %arg2: i32, %arg3: i32) -> (i32, i32, i32, i32) {
    %c1_i32 = arith.constant 1 : i32
    %0 = arith.muli %arg2, %c1_i32 : i32
    %1 = arith.addi %0, %arg3 : i32
    %c0_i32 = arith.constant 0 : i32
    %c0_i32_0 = arith.constant 0 : i32
    return %arg0, %arg1, %1, %c0_i32 : i32, i32, i32, i32
  }
}

</mosaic_0001>

<llo_original>
// kernel: tpu_custom_call.1
$region0: #{tpu_custom_call.1}
  #allocation0 [shape = 'u32[]', space=smem, size = 0x4, offset = 0x4, fixed_abs, tag = 'smem constant byte address 0x4 - core index']
  #allocation1 [shape = 'u32[144,128]{1,0:T(1,128)}', space=vmem, size = 0x12000, scoped, tag = 'internal scratch']
  #allocation6 [shape = 's32[]', space=sflag, size = 0x4, offset = 0, fixed_abs, tag = 'sflag constant byte address 0x0 - dummy sync flag']
  %s0 = inlined_call_operand.hbm [shape: f32[2,4,16,16], index: 0, kind: input, shape index: {}]
  %s1 = inlined_call_operand.hbm [shape: f32[4,4,32,32], index: 1, kind: output, shape index: {}]
  %s2 = sld [smem:[#allocation0]]
  $region41: #{tpu_custom_call.1} parent=0
    _
  %s4 = ssub.s32 1, %s2
  %s5 = scalar_select 0, %s4, %s2
  $region1: #{tpu_custom_call.1} parent=0
    #allocation2 [shape = 'u8[65536]{0}', space=vmem, size = 0x10000, scoped, tag = 'input window, operand 0, single buffered']
    #allocation3 [shape = 's32[2]{0}', space=sflag, size = 0x8, scoped, tag = 'scoped memory for tpu_custom_call.1']
    #allocation4 [shape = 's32[2]{0}', space=sflag, size = 0x8, scoped, tag = 'scoped memory for tpu_custom_call.1']
    #allocation5 [shape = 'u8[131072]{0}', space=vmem, size = 0x20000, scoped, tag = 'output window, operand 0']
    %6 = vsyncpa [#allocation3], 0
    %7 = vsyncpa [#allocation4], 0
    %s8 = scalar_lea.sflag [#allocation4], 1
    %9 = vsyncpa %s8, 0
    loop: start=0, step=1, limit=6
    $region2: #{tpu_custom_call.1} parent=1 // loop_pre_header
      _
    $region3: #{tpu_custom_call.1} parent=1 // loop_header
      %s11 = sphi 0, %s15
      %p12 = scmp.ge.s32.totalorder %s11, 6
      %s18 = sphi 0, %s44
      %s19 = sphi 0, %s40
      %s20 = sphi 0, %s36
      %s21 = sphi 0, %s32
      %s22 = sphi 0, %s18
      %s23 = sphi 0, %s19
      %s24 = sphi 0, %s20
      %s25 = sphi 0, %s21
      %s26 = sphi 0, %s22
      %s27 = sphi 0, %s23
      %s28 = sphi 0, %s24
      %s29 = sphi 0, %s25
      %s47 = sphi 0, %s49
      %s50 = sphi 0, %s47
      %s51 = sphi 0, %s50
      %s67 = sphi 0, %s51
      %s79 = sphi 0, %s81
      %s82 = sphi 0, %s79
      %s83 = sphi 0, %s82
      %s99 = sphi 0, %s83
    $region4: #{tpu_custom_call.1} parent=1 // loop_header_branch
      %14 = sbr.rel (%p12) target = $region8
    $region5: #{tpu_custom_call.1} parent=1 // loop_body
      %s16 = ssub.s32 %s11, 1
      %s17 = ssub.s32 %s11, 2
      %s30 = sadd.s32 1, %s21
      %p31 = scmp.ge.s32.totalorder %s30, 1
      %s32 = scalar_select %p31, 0, %s30
      %s33 = sadd.s32 1, %s20
      %s34 = scalar_select %p31, %s33, %s20
      %p35 = scmp.ge.s32.totalorder %s34, 2
      %s36 = scalar_select %p35, 0, %s34
      %s37 = sadd.s32 1, %s19
      %s38 = scalar_select %p35, %s37, %s19
      %p39 = scmp.ge.s32.totalorder %s38, 1
      %s40 = scalar_select %p39, 0, %s38
      %s41 = sadd.s32 1, %s18
      %s42 = scalar_select %p39, %s41, %s18
      %p43 = scmp.ge.s32.totalorder %s42, 2
      %s44 = scalar_select %p43, 0, %s42
      %s45 = ssub.s32 %s21, %s32
      %p46 = scmp.eq.s32.totalorder %s45, 0
      %s48 = sadd.s32 %s47, 1
      %s49 = scalar_select %p46, %s47, %s48
      %p52 = pneg %p46
      %p53 = scmp.eq.s32.totalorder %s11, 3
      %p54 = por %p52, %p53
      %p55 = scmp.ne.s32.totalorder %s47, %s50
      %p56 = scmp.eq.s32.totalorder %s11, 0
      %p57 = por %p55, %p56
      %p58 = scmp.ne.s32.totalorder %s47, %s50
      %p59 = scmp.eq.s32.totalorder %s16, 3
      %p60 = por %p58, %p59
      %p61 = scmp.ne.s32.totalorder %s50, %s51
      %p62 = scmp.eq.s32.totalorder %s16, 0
      %p63 = por %p61, %p62
      %p64 = scmp.ne.s32.totalorder %s50, %s51
      %p65 = scmp.eq.s32.totalorder %s17, 3
      %p66 = por %p64, %p65
      %p68 = scmp.ne.s32.totalorder %s51, %s67
      %p69 = scmp.eq.s32.totalorder %s17, 0
      %p70 = por %p68, %p69
      %s71 = sadd.s32 %s20, %s21
      %s72 = sadd.s32 %s36, %s32
      %s73 = ssub.s32 %s18, %s44
      %s74 = ssub.s32 %s19, %s40
      %s75 = sor.u32 %s73, %s74
      %s76 = ssub.s32 %s71, %s72
      %s77 = sor.u32 %s75, %s76
      %p78 = scmp.eq.s32.totalorder %s77, 0
      %s80 = sadd.s32 %s79, 1
      %s81 = scalar_select %p78, %s79, %s80
      %p84 = pneg %p78
      %p85 = scmp.eq.s32.totalorder %s11, 3
      %p86 = por %p84, %p85
      %p87 = scmp.ne.s32.totalorder %s79, %s82
      %p88 = scmp.eq.s32.totalorder %s11, 0
      %p89 = por %p87, %p88
      %p90 = scmp.ne.s32.totalorder %s79, %s82
      %p91 = scmp.eq.s32.totalorder %s16, 3
      %p92 = por %p90, %p91
      %p93 = scmp.ne.s32.totalorder %s82, %s83
      %p94 = scmp.eq.s32.totalorder %s16, 0
      %p95 = por %p93, %p94
      %p96 = scmp.ne.s32.totalorder %s82, %s83
      %p97 = scmp.eq.s32.totalorder %s17, 3
      %p98 = por %p96, %p97
      %p100 = scmp.ne.s32.totalorder %s83, %s99
      %p101 = scmp.eq.s32.totalorder %s17, 0
      %p102 = por %p100, %p101
      %p103 = scmp.le.s32.totalorder 1, %s11
      %p104 = scmp.lt.s32.totalorder %s11, 5
      %p105 = pnand %p103, %p104
      %p106 = pneg %p105
      // Predicated region
      $region9: #{tpu_custom_call.1} parent=5 // pred_check
        _
      $region10: #{tpu_custom_call.1} parent=5 // pred_check_branch
        %108 = sbr.rel (%p105) target = $region12
      $region11: #{tpu_custom_call.1} parent=5 // pred_region
        %s109 = ssub.s32 %s11, 1
        // Predicated region
        $region13: #{tpu_custom_call.1} parent=11 // pred_check
          %p110 = pneg %p63
        $region14: #{tpu_custom_call.1} parent=11 // pred_check_branch
          %112 = sbr.rel (%p110) target = $region16
        $region15: #{tpu_custom_call.1} parent=11 // pred_region
          %s113 = smul.u32 2, %s25
          %s115 = ssub.s32 2048, 2048
          %116 = vsyncadd [#allocation3], %s115
          %s117 = smul.addr %s113, 128
          %s118 = scalar_lea.hbm %s0, %s117
          %s119 = sshll.u32 [#allocation2], 4
          %s120 = int_to_ptr.vmem [resolvable:$true] %s119
          %125 = dma.hbm_to_vmem [thread:$0]  %s118, 2048, %s120, [#allocation3], 128, 128, 8
        $region16: #{tpu_custom_call.1} parent=11 // pred_fallthru
          _
      $region12: #{tpu_custom_call.1} parent=5 // pred_fallthru
        _
      %p126 = scmp.lt.s32.totalorder %s11, 4
      // Predicated region
      $region17: #{tpu_custom_call.1} parent=5 // pred_check
        %p127 = pneg %p126
      $region18: #{tpu_custom_call.1} parent=5 // pred_check_branch
        %129 = sbr.rel (%p127) target = $region20
      $region19: #{tpu_custom_call.1} parent=5 // pred_region
        _
      $region20: #{tpu_custom_call.1} parent=5 // pred_fallthru
        _
      %p130 = scmp.le.s32.totalorder 1, %s11
      %p131 = scmp.lt.s32.totalorder %s11, 5
      %p132 = pnand %p130, %p131
      %p133 = pneg %p132
      // Predicated region
      $region21: #{tpu_custom_call.1} parent=5 // pred_check
        _
      $region22: #{tpu_custom_call.1} parent=5 // pred_check_branch
        %135 = sbr.rel (%p132) target = $region24
      $region23: #{tpu_custom_call.1} parent=5 // pred_region
        %s136 = ssub.s32 %s11, 1
        // Predicated region
        $region25: #{tpu_custom_call.1} parent=23 // pred_check
          %p137 = pneg %p63
        $region26: #{tpu_custom_call.1} parent=23 // pred_check_branch
          %139 = sbr.rel (%p137) target = $region28
        $region27: #{tpu_custom_call.1} parent=23 // pred_region
          %140 = dma.done [#allocation3], 2048
        $region28: #{tpu_custom_call.1} parent=23 // pred_fallthru
          _
        %p141 = pneg %p63
        %p142 = pneg %p60
        %p143 = pneg %p95
        %p144 = pneg %p92
        %s145 = sand.u32 %s82, 1
        %s146 = scalar_lea.sflag [#allocation4], %s145
        %s147 = sand.u32 %s82, 1
        %s148 = smul.addr %s147, 128
        %s149 = scalar_lea.vmem [#allocation5], %s148
        %s150 = smul.u32 2, %s25
        %s151 = sadd.s32 %s24, %s25
        %s152 = smul.u32 2, %s22
        %s153 = smul.u32 4, %s23
        %s154 = smul.u32 2, %s151
        %v155 = vld [vmem:[#allocation2] sm:$0xff]
        %v156 = vld [vmem:[#allocation2 + $0x8] sm:$0xff]
        %v157 = vld [vmem:[#allocation2 + $0x10] sm:$0xff]
        %v158 = vld [vmem:[#allocation2 + $0x18] sm:$0xff]
        %v159 = vld [vmem:[#allocation2 + $0x20] sm:$0xff]
        %v160 = vld [vmem:[#allocation2 + $0x28] sm:$0xff]
        %v161 = vld [vmem:[#allocation2 + $0x30] sm:$0xff]
        %v162 = vld [vmem:[#allocation2 + $0x38] sm:$0xff]
        %v163 = vld [vmem:[#allocation2 + $0x40] sm:$0xff]
        %v164 = vld [vmem:[#allocation2 + $0x48] sm:$0xff]
        %v165 = vld [vmem:[#allocation2 + $0x50] sm:$0xff]
        %v166 = vld [vmem:[#allocation2 + $0x58] sm:$0xff]
        %v167 = vld [vmem:[#allocation2 + $0x60] sm:$0xff]
        %v168 = vld [vmem:[#allocation2 + $0x68] sm:$0xff]
        %v169 = vld [vmem:[#allocation2 + $0x70] sm:$0xff]
        %v170 = vld [vmem:[#allocation2 + $0x78] sm:$0xff]
        %vm171 = vcmask 130048
        %172 = vst.msk [vmem:[%s149] sm:$0xff] %vm171, %v155
        %173 = vst.msk [vmem:[%s149 + $0x8] sm:$0xff] %vm171, %v156
        %174 = vst.msk [vmem:[%s149 + $0x10] sm:$0xff] %vm171, %v157
        %175 = vst.msk [vmem:[%s149 + $0x18] sm:$0xff] %vm171, %v158
        %176 = vst.msk [vmem:[%s149 + $0x20] sm:$0xff] %vm171, %v159
        %177 = vst.msk [vmem:[%s149 + $0x28] sm:$0xff] %vm171, %v160
        %178 = vst.msk [vmem:[%s149 + $0x30] sm:$0xff] %vm171, %v161
        %179 = vst.msk [vmem:[%s149 + $0x38] sm:$0xff] %vm171, %v162
        %180 = vst.msk [vmem:[%s149 + $0x40] sm:$0xff] %vm171, %v163
        %181 = vst.msk [vmem:[%s149 + $0x48] sm:$0xff] %vm171, %v164
        %182 = vst.msk [vmem:[%s149 + $0x50] sm:$0xff] %vm171, %v165
        %183 = vst.msk [vmem:[%s149 + $0x58] sm:$0xff] %vm171, %v166
        %184 = vst.msk [vmem:[%s149 + $0x60] sm:$0xff] %vm171, %v167
        %185 = vst.msk [vmem:[%s149 + $0x68] sm:$0xff] %vm171, %v168
        %186 = vst.msk [vmem:[%s149 + $0x70] sm:$0xff] %vm171, %v169
        %187 = vst.msk [vmem:[%s149 + $0x78] sm:$0xff] %vm171, %v170
        %204 = vrot.lane.b32.xlu0 %v155, 16
        %v205 = vpop.permute.xlu0 %204
        %206 = vrot.lane.b32.xlu0 %v156, 16
        %v207 = vpop.permute.xlu0 %206
        %208 = vrot.lane.b32.xlu0 %v157, 16
        %v209 = vpop.permute.xlu0 %208
        %210 = vrot.lane.b32.xlu0 %v158, 16
        %v211 = vpop.permute.xlu0 %210
        %212 = vrot.lane.b32.xlu0 %v159, 16
        %v213 = vpop.permute.xlu0 %212
        %214 = vrot.lane.b32.xlu0 %v160, 16
        %v215 = vpop.permute.xlu0 %214
        %216 = vrot.lane.b32.xlu0 %v161, 16
        %v217 = vpop.permute.xlu0 %216
        %218 = vrot.lane.b32.xlu0 %v162, 16
        %v219 = vpop.permute.xlu0 %218
        %220 = vrot.lane.b32.xlu0 %v163, 16
        %v221 = vpop.permute.xlu0 %220
        %222 = vrot.lane.b32.xlu0 %v164, 16
        %v223 = vpop.permute.xlu0 %222
        %224 = vrot.lane.b32.xlu0 %v165, 16
        %v225 = vpop.permute.xlu0 %224
        %226 = vrot.lane.b32.xlu0 %v166, 16
        %v227 = vpop.permute.xlu0 %226
        %228 = vrot.lane.b32.xlu0 %v167, 16
        %v229 = vpop.permute.xlu0 %228
        %230 = vrot.lane.b32.xlu0 %v168, 16
        %v231 = vpop.permute.xlu0 %230
        %232 = vrot.lane.b32.xlu0 %v169, 16
        %v233 = vpop.permute.xlu0 %232
        %234 = vrot.lane.b32.xlu0 %v170, 16
        %v235 = vpop.permute.xlu0 %234
        %vm252 = vcmask 261248
        %253 = vst.msk [vmem:[%s149] sm:$0xff] %vm252, %v205
        %254 = vst.msk [vmem:[%s149 + $0x8] sm:$0xff] %vm252, %v207
        %255 = vst.msk [vmem:[%s149 + $0x10] sm:$0xff] %vm252, %v209
        %256 = vst.msk [vmem:[%s149 + $0x18] sm:$0xff] %vm252, %v211
        %257 = vst.msk [vmem:[%s149 + $0x20] sm:$0xff] %vm252, %v213
        %258 = vst.msk [vmem:[%s149 + $0x28] sm:$0xff] %vm252, %v215
        %259 = vst.msk [vmem:[%s149 + $0x30] sm:$0xff] %vm252, %v217
        %260 = vst.msk [vmem:[%s149 + $0x38] sm:$0xff] %vm252, %v219
        %261 = vst.msk [vmem:[%s149 + $0x40] sm:$0xff] %vm252, %v221
        %262 = vst.msk [vmem:[%s149 + $0x48] sm:$0xff] %vm252, %v223
        %263 = vst.msk [vmem:[%s149 + $0x50] sm:$0xff] %vm252, %v225
        %264 = vst.msk [vmem:[%s149 + $0x58] sm:$0xff] %vm252, %v227
        %265 = vst.msk [vmem:[%s149 + $0x60] sm:$0xff] %vm252, %v229
        %266 = vst.msk [vmem:[%s149 + $0x68] sm:$0xff] %vm252, %v231
        %267 = vst.msk [vmem:[%s149 + $0x70] sm:$0xff] %vm252, %v233
        %268 = vst.msk [vmem:[%s149 + $0x78] sm:$0xff] %vm252, %v235
        %s269 = sand.u32 %s82, 1
        %s270 = scalar_lea.sflag [#allocation4], %s269
        %s271 = sand.u32 %s82, 1
        %s272 = smul.addr %s271, 128
        %s273 = scalar_lea.vmem [#allocation5], %s272
        // Predicated region
        $region29: #{tpu_custom_call.1} parent=23 // pred_check
          %p274 = pneg %p92
        $region30: #{tpu_custom_call.1} parent=23 // pred_check_branch
          %276 = sbr.rel (%p274) target = $region32
        $region31: #{tpu_custom_call.1} parent=23 // pred_region
          #allocation7 [shape = 'u32[6]{0}', space=smem, size = 0x18, scoped, tag = 'DMA stride descriptor']
          %s277 = sadd.s32 %s24, %s25
          %s278 = smul.u32 2, %s22
          %s279 = smul.u32 4, %s23
          %s280 = smul.u32 2, %s277
          %s282 = ssub.s32 2048, 2048
          %283 = vsyncadd %s270, %s282
          %s284 = smul.addr %s279, 4
          %s285 = sadd.s32 %s280, %s284
          %s286 = smul.addr %s278, 16
          %s287 = sadd.s32 %s285, %s286
          %s288 = smul.addr %s287, 128
          %s289 = scalar_lea.hbm %s1, %s288
          %s291 = sshll.u32 1, 14
          %s292 = sxor.u32 4294967295, %s291
          %s295 = sshll.u32 7, 18
          %s296 = sxor.u32 4294967295, %s295
          %s297 = sand.u32 0, %s296
          %s299 = sor.u32 %s297, 0
          %s301 = sshll.u32 3, 24
          %s302 = sxor.u32 4294967295, %s301
          %s303 = sand.u32 %s299, %s302
          %s305 = sor.u32 %s303, 0
          %s306 = sshll.u32 %s273, 4
          %s307 = int_to_ptr.vmem [resolvable:$true] %s306
          %313 = sst [smem:[#allocation7]] 256
          %s314 = scalar_lea.smem [#allocation7], 1
          %315 = sst [smem:[%s314]] 512
          %s316 = scalar_lea.smem [#allocation7], 2
          %317 = sst [smem:[%s316]] 2
          %s318 = scalar_lea.smem [#allocation7], 3
          %319 = sst [smem:[%s318]] 128
          %s320 = scalar_lea.smem [#allocation7], 4
          %321 = sst [smem:[%s320]] 128
          %s322 = scalar_lea.smem [#allocation7], 5
          %323 = sst [smem:[%s322]] 8
          %325 = dma.general %s307, 2048, %s289, %s270, [#allocation6], [#allocation7], %s305, 0
        $region32: #{tpu_custom_call.1} parent=23 // pred_fallthru
          _
      $region24: #{tpu_custom_call.1} parent=5 // pred_fallthru
        _
      %p326 = scmp.le.s32.totalorder 2, %s11
      // Predicated region
      $region33: #{tpu_custom_call.1} parent=5 // pred_check
        %p327 = pneg %p326
      $region34: #{tpu_custom_call.1} parent=5 // pred_check_branch
        %329 = sbr.rel (%p327) target = $region36
      $region35: #{tpu_custom_call.1} parent=5 // pred_region
        %s330 = ssub.s32 %s11, 2
        // Predicated region
        $region37: #{tpu_custom_call.1} parent=35 // pred_check
          %p331 = pneg %p98
        $region38: #{tpu_custom_call.1} parent=35 // pred_check_branch
          %333 = sbr.rel (%p331) target = $region40
        $region39: #{tpu_custom_call.1} parent=35 // pred_region
          %s334 = sand.u32 %s83, 1
          %s335 = scalar_lea.sflag [#allocation4], %s334
          %s336 = sand.u32 %s83, 1
          %s337 = smul.addr %s336, 128
          %s338 = scalar_lea.vmem [#allocation5], %s337
          %339 = dma.done %s335, 2048
        $region40: #{tpu_custom_call.1} parent=35 // pred_fallthru
          _
      $region36: #{tpu_custom_call.1} parent=5 // pred_fallthru
        _
    $region6: #{tpu_custom_call.1} parent=1 // loop_footer
      %s15 = sadd.s32 1, %s11
    $region7: #{tpu_custom_call.1} parent=1 // loop_footer_branch
      %10 = sbr.rel target = $region3
    $region8: #{tpu_custom_call.1} parent=1 // loop_exit
      _
    %340 = vsyncpa [#allocation3], 1
    %s341 = scalar_lea.sflag [#allocation3], 1
    %342 = vsyncpa %s341, 1
    %343 = vsyncpa [#allocation4], 1
    %s344 = scalar_lea.sflag [#allocation4], 1
    %345 = vsyncpa %s344, 1

</llo_original>
